<compile_context>
chip_gen: v5e
topology: v5e:2x2
jax: 0.10.0
libtpu: 0.0.40
codegen_flags: <defaults>
</compile_context>

<pallas_src>
import functools

import jax
import jax.numpy as jnp
from jax.experimental import pallas as pl
from jax.experimental.pallas import tpu as pltpu

LANES = 128
SUBLANES = 8
TARGET_BLOCK_BYTES = 4 * 1024 * 1024   # per input per block
VMEM_LIMIT_BYTES = 48 * 1024 * 1024    # explicit scoped-VMEM budget (fits all gens)


def _tensorcores_per_chip():
    # v7x has 2 TensorCores per chip; v5e/v6e have 1.  A 2-way leading
    # "parallel" grid axis only pays off on multi-TC chips — on single-TC
    # chips it is just a serial outer loop plus dummy-block overhead.
    try:
        kind = jax.devices()[0].device_kind.lower()
    except Exception:
        return 1
    return 2 if "v7" in kind else 1


def _l1_kernel(x_ref, t_ref, o_ref, acc_ref, *,
               rows, tile_rows, steps, n_blocks, mask_boundary):
    s = pl.program_id(0)   # split (sharded across TCs on v7x)
    i = pl.program_id(1)   # row-tile step within the split (arbitrary)

    @pl.when(i == 0)
    def _():
        acc_ref[...] = jnp.zeros_like(acc_ref)

    blk = s * steps + i    # unclamped global block index

    def _accumulate(diff):
        # Keep the running sum vreg-shaped: only VPU adds per step; the
        # expensive cross-lane/sublane reduce runs once in the epilogue.
        acc_ref[...] += diff.reshape(-1, SUBLANES, LANES).sum(axis=0)

    def _absdiff():
        x = x_ref[...].astype(jnp.float32)
        t = t_ref[...].astype(jnp.float32)
        return jnp.abs(x - t)

    if mask_boundary:
        interior = blk < n_blocks - 1

        @pl.when(interior)
        def _():
            # Hot path: no iota / compare / select for interior blocks.
            _accumulate(_absdiff())

        @pl.when(jnp.logical_not(interior))
        def _():
            # Last (possibly partial) block, or a clamped out-of-range dummy
            # block of the last split: mask by global row index.
            row0 = blk * tile_rows
            row_ids = row0 + jax.lax.broadcasted_iota(
                jnp.int32, (tile_rows, LANES), 0)
            _accumulate(jnp.where(row_ids < rows, _absdiff(), jnp.float32(0.0)))
    else:
        _accumulate(_absdiff())

    @pl.when(i == pl.num_programs(1) - 1)
    def _():
        o_ref[0, 0] = jnp.sum(acc_ref[...])


def l1_loss(inp, target):
    assert inp.shape == target.shape, "L1Loss expects matching shapes"
    n = inp.size
    if n == 0:
        # PyTorch's mean reduction over an empty tensor is NaN.
        return jnp.asarray(jnp.nan, dtype=inp.dtype)

    dtype = inp.dtype
    itemsize = jnp.dtype(dtype).itemsize
    # Packed-sublane alignment: 8 rows for 32-bit, 16 for bf16, 32 for 8-bit.
    pack = max(SUBLANES, 32 // itemsize)
    min_elems = pack * LANES

    x = inp.reshape(-1)
    t = target.reshape(-1)

    tail_sum = None
    if n < min_elems:
        # Tiny input: pad to a single minimal tile (|0 - 0| contributes 0).
        pad = min_elems - n
        x = jnp.pad(x, (0, pad))
        t = jnp.pad(t, (0, pad))
        main = min_elems
    else:
        # Lane-aligned prefix goes through the kernel; the <128-element tail
        # is summed here, avoiding a full-array pad copy of both inputs.
        main = (n // LANES) * LANES
        if main != n:
            tail_sum = jnp.sum(
                jnp.abs(x[main:].astype(jnp.float32)
                        - t[main:].astype(jnp.float32)))
            x = x[:main]
            t = t[:main]

    rows = main // LANES                       # >= pack
    x2 = x.reshape(rows, LANES)
    t2 = t.reshape(rows, LANES)

    # dtype-aware tile: ~TARGET_BLOCK_BYTES per input per block, pack-aligned,
    # never exceeding the (pack-aligned) array extent.
    max_tile_rows = max(
        pack, (TARGET_BLOCK_BYTES // (LANES * itemsize)) // pack * pack)
    tile_rows = min(max_tile_rows, (rows // pack) * pack)
    n_blocks = pl.cdiv(rows, tile_rows)

    num_splits = min(_tensorcores_per_chip(), n_blocks)
    steps = pl.cdiv(n_blocks, num_splits)

    has_dummy = num_splits * steps != n_blocks
    mask_boundary = has_dummy or (rows % tile_rows != 0)

    if has_dummy:
        def in_map(s, i):
            # Fully-out-of-range trailing blocks of the last split re-read a
            # valid block; the in-kernel mask zeroes their contribution.
            return (jnp.minimum(s * steps + i, n_blocks - 1), 0)
    else:
        def in_map(s, i):
            return (s * steps + i, 0)

    kernel = functools.partial(
        _l1_kernel, rows=rows, tile_rows=tile_rows, steps=steps,
        n_blocks=n_blocks, mask_boundary=mask_boundary)

    partials = pl.pallas_call(
        kernel,
        out_shape=jax.ShapeDtypeStruct((num_splits, 1), jnp.float32),
        grid_spec=pltpu.PrefetchScalarGridSpec(
            num_scalar_prefetch=0,
            grid=(num_splits, steps),
            in_specs=[
                pl.BlockSpec((tile_rows, LANES), in_map),
                pl.BlockSpec((tile_rows, LANES), in_map),
            ],
            out_specs=pl.BlockSpec(
                (1, 1), lambda s, i: (s, 0), memory_space=pltpu.SMEM),
            scratch_shapes=[pltpu.VMEM((SUBLANES, LANES), jnp.float32)],
        ),
        compiler_params=pltpu.CompilerParams(
            # TODO(synk): on v7x verify via xprof that the leading "parallel"
            # axis actually shards across both TensorCores; if not, switch it
            # to pltpu.CORE_PARALLEL.
            dimension_semantics=("parallel", "arbitrary"),
            vmem_limit_bytes=VMEM_LIMIT_BYTES),
        cost_estimate=pl.CostEstimate(
            flops=2 * n,
            transcendentals=0,
            bytes_accessed=2 * main * itemsize + num_splits * 4),
    )(x2, t2)

    # Combine per-split partials (+ tail) and apply the mean over the TRUE count.
    total = jnp.sum(partials)
    if tail_sum is not None:
        total = total + tail_sum
    return (total / jnp.float32(n)).astype(dtype)


if __name__ == "__main__":
    key = jax.random.PRNGKey(0)
    keys = jax.random.split(key, 8)

    # Primary case: the module's typical 4-D input (lane-aligned size).
    shape = (2, 4, 16, 16)
    inp = jax.random.normal(keys[0], shape, dtype=jnp.float32)
    tgt = jax.random.normal(keys[1], shape, dtype=jnp.float32)
    loss = l1_loss(inp, tgt)
    jax.block_until_ready(loss)
    ref = jnp.mean(jnp.abs(inp - tgt))
    assert jnp.allclose(loss, ref, rtol=1e-5, atol=1e-6), (loss, ref)

    # Tiny, non-lane-aligned size exercises the pad path.
    shape2 = (3, 5, 7)
    inp2 = jax.random.normal(keys[2], shape2, dtype=jnp.float32)
    tgt2 = jax.random.normal(keys[3], shape2, dtype=jnp.float32)
    loss2 = l1_loss(inp2, tgt2)
    jax.block_until_ready(loss2)
    ref2 = jnp.mean(jnp.abs(inp2 - tgt2))
    assert jnp.allclose(loss2, ref2, rtol=1e-5, atol=1e-6), (loss2, ref2)

    # Larger non-lane-aligned size: prefix-through-kernel + wrapper tail +
    # in-kernel boundary masking.
    shape3 = (17, 129)
    inp3 = jax.random.normal(keys[4], shape3, dtype=jnp.float32)
    tgt3 = jax.random.normal(keys[5], shape3, dtype=jnp.float32)
    loss3 = l1_loss(inp3, tgt3)
    jax.block_until_ready(loss3)
    ref3 = jnp.mean(jnp.abs(inp3 - tgt3))
    assert jnp.allclose(loss3, ref3, rtol=1e-5, atol=1e-6), (loss3, ref3)

    # bf16 exercises the dtype-aware (16,128)-aligned tiling path.
    shape4 = (4, 64, 128)
    inp4 = jax.random.normal(keys[6], shape4, dtype=jnp.bfloat16)
    tgt4 = jax.random.normal(keys[7], shape4, dtype=jnp.bfloat16)
    loss4 = l1_loss(inp4, tgt4)
    jax.block_until_ready(loss4)
    ref4 = jnp.mean(jnp.abs(inp4.astype(jnp.float32) - tgt4.astype(jnp.float32)))
    assert jnp.allclose(loss4.astype(jnp.float32), ref4, rtol=2e-2, atol=2e-2), (
        loss4, ref4)

    print("KERNEL_OK")
</pallas_src>

<mosaic_0001>
module attributes {stable_mosaic.version = 11 : i64} {
  func.func @_l1_kernel(%arg0: i32, %arg1: i32, %arg2: memref<16x128xf32, #tpu.memory_space<vmem>>, %arg3: memref<16x128xf32, #tpu.memory_space<vmem>>, %arg4: memref<1x1xf32, #tpu.memory_space<smem>>, %arg5: memref<8x128xf32, #tpu.memory_space<vmem>>) attributes {dimension_semantics = [#tpu.dimension_semantics<parallel>, #tpu.dimension_semantics<arbitrary>], iteration_bounds = array<i64: 1, 1>, scalar_prefetch = 0 : i64, scratch_operands = 1 : i64, tpu.core_type = #tpu.core_type<tc>, window_params = [{transform_indices = @transform_0, window_bounds = array<i64: 16, 128>}, {transform_indices = @transform_1, window_bounds = array<i64: 16, 128>}, {transform_indices = @transform_2, window_bounds = array<i64: 1, 1>}]} {
    %c0_i32 = arith.constant 0 : i32
    %0 = arith.cmpi eq, %arg1, %c0_i32 : i32
    %1 = arith.extui %0 : i1 to i32
    %c0_i32_0 = arith.constant 0 : i32
    %2 = arith.cmpi ne, %1, %c0_i32_0 : i32
    scf.if %2 {
      %cst_10 = arith.constant 0.000000e+00 : f32
      %15 = vector.broadcast %cst_10 : f32 to vector<8x128xf32>
      %c0_11 = arith.constant 0 : index
      %c0_12 = arith.constant 0 : index
      %16 = vector.load %arg5[%c0_11, %c0_12] : memref<8x128xf32, #tpu.memory_space<vmem>>, vector<8x128xf32>
      tpu.vector_store %arg5[%c0_11, %c0_12], %15 {strides = array<i32>} : memref<8x128xf32, #tpu.memory_space<vmem>>, vector<8x128xf32>,
    } else {
    }
    %c0 = arith.constant 0 : index
    %c0_1 = arith.constant 0 : index
    %3 = vector.load %arg2[%c0, %c0_1] : memref<16x128xf32, #tpu.memory_space<vmem>>, vector<16x128xf32>
    %c0_2 = arith.constant 0 : index
    %c0_3 = arith.constant 0 : index
    %4 = vector.load %arg3[%c0_2, %c0_3] : memref<16x128xf32, #tpu.memory_space<vmem>>, vector<16x128xf32>
    %5 = arith.subf %3, %4 : vector<16x128xf32>
    %6 = math.absf %5 : vector<16x128xf32>
    %c0_4 = arith.constant 0 : index
    %c0_5 = arith.constant 0 : index
    %7 = vector.load %arg5[%c0_4, %c0_5] : memref<8x128xf32, #tpu.memory_space<vmem>>, vector<8x128xf32>
    %8 = vector.shape_cast %6 : vector<16x128xf32> to vector<2x8x128xf32>
    %cst = arith.constant dense<0.000000e+00> : vector<8x128xf32>
    %9 = vector.multi_reduction <add>, %8, %cst [0] : vector<2x8x128xf32> to vector<8x128xf32>
    %10 = arith.addf %7, %9 : vector<8x128xf32>
    %c0_6 = arith.constant 0 : index
    %c0_7 = arith.constant 0 : index
    %11 = vector.load %arg5[%c0_6, %c0_7] : memref<8x128xf32, #tpu.memory_space<vmem>>, vector<8x128xf32>
    tpu.vector_store %arg5[%c0_6, %c0_7], %10 {strides = array<i32>} : memref<8x128xf32, #tpu.memory_space<vmem>>, vector<8x128xf32>,
    %c0_i32_8 = arith.constant 0 : i32
    %12 = arith.cmpi eq, %arg1, %c0_i32_8 : i32
    %13 = arith.extui %12 : i1 to i32
    %c0_i32_9 = arith.constant 0 : i32
    %14 = arith.cmpi ne, %13, %c0_i32_9 : i32
    scf.if %14 {
      %c0_10 = arith.constant 0 : index
      %c0_11 = arith.constant 0 : index
      %15 = vector.load %arg5[%c0_10, %c0_11] : memref<8x128xf32, #tpu.memory_space<vmem>>, vector<8x128xf32>
      %16 = vector.shape_cast %15 : vector<8x128xf32> to vector<1x8x128xf32>
      %cst_12 = arith.constant dense<0.000000e+00> : vector<1xf32>
      %17 = vector.multi_reduction <add>, %16, %cst_12 [1, 2] : vector<1x8x128xf32> to vector<1xf32>
      %18 = vector.shape_cast %17 : vector<1xf32> to vector<1x1x1xf32>
      %19 = vector.extract %18[0, 0, 0] : f32 from vector<1x1x1xf32>
      %c0_13 = arith.constant 0 : index
      %c0_14 = arith.constant 0 : index
      %20 = memref.load %arg4[%c0_13, %c0_14] : memref<1x1xf32, #tpu.memory_space<smem>>
      memref.store %19, %arg4[%c0_13, %c0_14] : memref<1x1xf32, #tpu.memory_space<smem>>
    } else {
    }
    return
  }
  func.func @transform_0(%arg0: i32, %arg1: i32) -> (i32, i32) {
    %c1_i32 = arith.constant 1 : i32
    %0 = arith.muli %arg0, %c1_i32 : i32
    %1 = arith.addi %0, %arg1 : i32
    %c0_i32 = arith.constant 0 : i32
    %c0_i32_0 = arith.constant 0 : i32
    return %1, %c0_i32 : i32, i32
  }
  func.func @transform_1(%arg0: i32, %arg1: i32) -> (i32, i32) {
    %c1_i32 = arith.constant 1 : i32
    %0 = arith.muli %arg0, %c1_i32 : i32
    %1 = arith.addi %0, %arg1 : i32
    %c0_i32 = arith.constant 0 : i32
    %c0_i32_0 = arith.constant 0 : i32
    return %1, %c0_i32 : i32, i32
  }
  func.func @transform_2(%arg0: i32, %arg1: i32) -> (i32, i32) {
    %c0_i32 = arith.constant 0 : i32
    %c0_i32_0 = arith.constant 0 : i32
    return %arg0, %c0_i32 : i32, i32
  }
}

</mosaic_0001>

<llo_original>
// kernel: tpu_custom_call.1
$region0: #{tpu_custom_call.1}
  #allocation0 [shape = 'u32[]', space=smem, size = 0x4, offset = 0x4, fixed_abs, tag = 'smem constant byte address 0x4 - core index']
  #allocation1 [shape = 'u32[72,128]{1,0:T(1,128)}', space=vmem, size = 0x9000, scoped, tag = 'internal scratch']
  #allocation2 [shape = 'f32[8,128]{1,0:T(8,128)}', space=vmem, size = 0x1000, scoped, tag = 'scratch operand']
  %s0 = inlined_call_operand.hbm [shape: f32[16,128], index: 0, kind: input, shape index: {}]
  %s1 = inlined_call_operand.hbm [shape: f32[16,128], index: 1, kind: input, shape index: {}]
  %s2 = inlined_call_operand.hbm [shape: f32[1,1], index: 2, kind: output, shape index: {}]
  %s3 = sld [smem:[#allocation0]]
  $region34: #{tpu_custom_call.1} parent=0
    _
  %s5 = ssub.s32 1, %s3
  %s6 = scalar_select 0, %s5, %s3
  $region1: #{tpu_custom_call.1} parent=0
    #allocation3 [shape = 'u8[8192]{0}', space=vmem, size = 0x2000, scoped, tag = 'input window, operand 0, single buffered']
    #allocation4 [shape = 's32[1]{0}', space=sflag, size = 0x4, scoped, tag = 'scoped memory for tpu_custom_call.1']
    #allocation5 [shape = 's32[1]{0}', space=sflag, size = 0x4, scoped, tag = 'scoped memory for tpu_custom_call.1']
    #allocation6 [shape = 'u8[8192]{0}', space=vmem, size = 0x2000, scoped, tag = 'input window, operand 1, single buffered']
    #allocation7 [shape = 's32[1]{0}', space=sflag, size = 0x4, scoped, tag = 'scoped memory for tpu_custom_call.1']
    #allocation8 [shape = 'u8[512]{0}', space=smem, size = 0x200, scoped, tag = 'output window, operand 0, single buffered']
    %7 = vsyncpa [#allocation4], 0
    %8 = vsyncpa [#allocation7], 0
    %9 = vsyncpa [#allocation5], 0
    // Predicated region
    $region2: #{tpu_custom_call.1} parent=1 // pred_check
      _
    $region3: #{tpu_custom_call.1} parent=1 // pred_check_branch
      %11 = sbr.rel (0) target = $region5
    $region4: #{tpu_custom_call.1} parent=1 // pred_region
      %s12 = sadd.s32 0, 0
      %s13 = smul.u32 2, %s12
      %15 = vsyncadd [#allocation4], 0
      %s16 = smul.addr %s13, 8
      %s17 = scalar_lea.hbm %s0, %s16
      %s18 = sshll.u32 %s17, 4
      %s19 = int_to_ptr.hbm [resolvable:$true] %s18
      %s20 = sshll.u32 [#allocation3], 4
      %s21 = int_to_ptr.vmem [resolvable:$true] %s20
      %26 = dma.hbm_to_vmem [thread:$0]  %s19, 256, %s21, [#allocation4], 128, 128, 8
    $region5: #{tpu_custom_call.1} parent=1 // pred_fallthru
      _
    // Predicated region
    $region6: #{tpu_custom_call.1} parent=1 // pred_check
      _
    $region7: #{tpu_custom_call.1} parent=1 // pred_check_branch
      %28 = sbr.rel (0) target = $region9
    $region8: #{tpu_custom_call.1} parent=1 // pred_region
      %s29 = sadd.s32 0, 0
      %s30 = smul.u32 2, %s29
      %32 = vsyncadd [#allocation7], 0
      %s33 = smul.addr %s30, 8
      %s34 = scalar_lea.hbm %s1, %s33
      %s35 = sshll.u32 %s34, 4
      %s36 = int_to_ptr.hbm [resolvable:$true] %s35
      %s37 = sshll.u32 [#allocation6], 4
      %s38 = int_to_ptr.vmem [resolvable:$true] %s37
      %43 = dma.hbm_to_vmem [thread:$0]  %s36, 256, %s38, [#allocation7], 128, 128, 8
    $region9: #{tpu_custom_call.1} parent=1 // pred_fallthru
      _
    // Predicated region
    $region10: #{tpu_custom_call.1} parent=1 // pred_check
      _
    $region11: #{tpu_custom_call.1} parent=1 // pred_check_branch
      %45 = sbr.rel (0) target = $region13
    $region12: #{tpu_custom_call.1} parent=1 // pred_region
      %47 = dma.done [#allocation4], 256
    $region13: #{tpu_custom_call.1} parent=1 // pred_fallthru
      _
    // Predicated region
    $region14: #{tpu_custom_call.1} parent=1 // pred_check
      _
    $region15: #{tpu_custom_call.1} parent=1 // pred_check_branch
      %49 = sbr.rel (0) target = $region17
    $region16: #{tpu_custom_call.1} parent=1 // pred_region
      %51 = dma.done [#allocation7], 256
    $region17: #{tpu_custom_call.1} parent=1 // pred_fallthru
      _
    %s52 = sadd.s32 0, 0
    %s53 = smul.u32 2, %s52
    %s54 = sadd.s32 0, 0
    %s55 = smul.u32 2, %s54
    %p56 = scmp.eq.s32.totalorder 0, 0
    // Predicated region
    $region18: #{tpu_custom_call.1} parent=1 // pred_check
      %p57 = pneg %p56
    $region19: #{tpu_custom_call.1} parent=1 // pred_check_branch
      %59 = sbr.rel (%p57) target = $region21
    $region20: #{tpu_custom_call.1} parent=1 // pred_region
      %60 = vst [vmem:[#allocation2] sm:$0xff] 0.0
    $region21: #{tpu_custom_call.1} parent=1 // pred_fallthru
      _
    %v61 = vld [vmem:[#allocation3] sm:$0xff]
    %v62 = vld [vmem:[#allocation3 + $0x8] sm:$0xff]
    %v63 = vld [vmem:[#allocation6] sm:$0xff]
    %v64 = vld [vmem:[#allocation6 + $0x8] sm:$0xff]
    %v65 = vsub.f32 %v61, %v63
    %v66 = vsub.f32 %v62, %v64
    %v67 = vand.u32 2147483647, %v65
    %v68 = vand.u32 2147483647, %v66
    %v69 = vld [vmem:[#allocation2] sm:$0xff]
    %v70 = vadd.f32 %v67, %v68
    %v71 = vadd.f32 %v69, %v70
    %72 = vst [vmem:[#allocation2] sm:$0xff] %v71
    // Predicated region
    $region22: #{tpu_custom_call.1} parent=1 // pred_check
      %p73 = pneg %p56
    $region23: #{tpu_custom_call.1} parent=1 // pred_check_branch
      %75 = sbr.rel (%p73) target = $region25
    $region24: #{tpu_custom_call.1} parent=1 // pred_region
      %v76 = vld [vmem:[#allocation2] sm:$0xff]
      %77 = vadd.xlane.f32.xlu0 %v76
      %v78 = vpop.xlane.xlu0 %77
      %v79 = vrot.slane %v78, 4
      %v80 = vadd.f32 %v78, %v79
      %v81 = vrot.slane %v80, 2
      %v82 = vadd.f32 %v80, %v81
      %v83 = vrot.slane %v82, 1
      %v84 = vadd.f32 %v82, %v83
      %s85 = vtos %v84
      %s86 = scalar_lea.smem [#allocation8], 0
      %87 = sst [smem:[%s86]] %s85
    $region25: #{tpu_custom_call.1} parent=1 // pred_fallthru
      _
    // Predicated region
    $region26: #{tpu_custom_call.1} parent=1 // pred_check
      _
    $region27: #{tpu_custom_call.1} parent=1 // pred_check_branch
      %89 = sbr.rel (0) target = $region29
    $region28: #{tpu_custom_call.1} parent=1 // pred_region
      %91 = vsyncadd [#allocation5], 0
      %s93 = sshll.u32 %s2, 4
      %s94 = int_to_ptr.hbm [resolvable:$true] %s93
      %96 = dma.smem_to_hbm [#allocation8], 16, %s94, [#allocation5]
    $region29: #{tpu_custom_call.1} parent=1 // pred_fallthru
      _
    // Predicated region
    $region30: #{tpu_custom_call.1} parent=1 // pred_check
      _
    $region31: #{tpu_custom_call.1} parent=1 // pred_check_branch
      %98 = sbr.rel (0) target = $region33
    $region32: #{tpu_custom_call.1} parent=1 // pred_region
      %100 = dma.done [#allocation5], 16
    $region33: #{tpu_custom_call.1} parent=1 // pred_fallthru
      _
    %101 = sfence
    %102 = vsyncpa [#allocation4], 1
    %103 = vsyncpa [#allocation7], 1
    %104 = vsyncpa [#allocation5], 1

</llo_original>
